<compile_context>
chip_gen: v7x
topology: tpu7x:2x2x1
jax: 0.10.0
libtpu: 0.0.40
codegen_flags: <defaults>
</compile_context>

<pallas_src>
import functools

import jax
import jax.numpy as jnp
import numpy as np
from jax.experimental import pallas as pl
from jax.experimental.pallas import tpu as pltpu


# ----------------------------------------------------------------------------
# Kernels
# ----------------------------------------------------------------------------
def _prepro_kernel_dense(w_ref, b_ref, x_ref, o_ref):
    """Dense 4-D path.  x_ref/o_ref: VMEM (n_blk, 3, rows_tile, 128)."""
    # Integer index on axis 1 (a major, non-tiled axis) -> dense (n_blk, rows, 128)
    # views: full vreg occupancy, unmasked loads/stores.
    x0 = x_ref[:, 0].astype(jnp.float32)
    x1 = x_ref[:, 1].astype(jnp.float32)
    x2 = x_ref[:, 2].astype(jnp.float32)
    for c in range(3):  # static unroll over the 3 output channels
        row = (w_ref[c, 0] * x0
               + w_ref[c, 1] * x1
               + w_ref[c, 2] * x2
               + b_ref[c])
        o_ref[:, c] = row.astype(o_ref.dtype)


def _prepro_kernel_chw(w_ref, b_ref, x_ref, o_ref):
    """Fallback 3-D path (HW % 128 != 0).  x_ref/o_ref: VMEM (n_blk, 3, tile_hw)."""
    x0 = x_ref[:, 0:1, :].astype(jnp.float32)
    x1 = x_ref[:, 1:2, :].astype(jnp.float32)
    x2 = x_ref[:, 2:3, :].astype(jnp.float32)
    for c in range(3):
        row = (w_ref[c, 0] * x0
               + w_ref[c, 1] * x1
               + w_ref[c, 2] * x2
               + b_ref[c])
        o_ref[:, c:c + 1, :] = row.astype(o_ref.dtype)


# ----------------------------------------------------------------------------
# Parameter construction (mirrors preprocess_conv_layer.__init__)
# ----------------------------------------------------------------------------
def make_prepro_params(mean_value=0.0, std_value=255.0, bgr_flag=False):
    if mean_value is None:
        mean_value = [0.0, 0.0, 0.0]
    if isinstance(mean_value, float):
        mean_value = [mean_value] * 3
    if isinstance(std_value, float):
        std_value = [std_value] * 3

    w = np.zeros((3, 3), dtype=np.float32)  # (c_out, c_in), 1x1 kernel squeezed
    if not bgr_flag:
        w[0, 0] = 1.0 / std_value[0]
        w[1, 1] = 1.0 / std_value[1]
        w[2, 2] = 1.0 / std_value[2]
    else:
        w[0, 2] = 1.0 / std_value[0]
        w[1, 1] = 1.0 / std_value[1]
        w[2, 0] = 1.0 / std_value[2]

    b = np.array(
        [
            -mean_value[0] / std_value[0],
            -mean_value[1] / std_value[1],
            -mean_value[2] / std_value[2],
        ],
        dtype=np.float32,
    )
    return jnp.asarray(w), jnp.asarray(b)


# ----------------------------------------------------------------------------
# Tiling selection (dense 4-D path)
# ----------------------------------------------------------------------------
def _cdiv(a, b):
    return -(-a // b)


def _round_up(a, m):
    return _cdiv(a, m) * m


def _choose_tiling(N, rows):
    """Pick (n_blk, rows_tile) for blocks of shape (n_blk, 3, rows_tile, 128)."""
    TARGET_ROWS = 1024   # ~1.5 MiB f32 per block side; dbl-buffered in+out ~6 MiB
    MIN_ROWS = 128       # never shrink a block below ~192 KiB of f32 payload
    TARGET_STEPS = 8     # enough grid steps for the pipeline / both v7x cores

    if rows >= TARGET_ROWS:
        n_blk, rows_tile = 1, TARGET_ROWS
    else:
        rows_tile = rows                                   # full extent (legal tile)
        n_blk = min(N, max(1, TARGET_ROWS // max(rows, 1)))  # fold images per block

    def steps(nb, rt):
        return _cdiv(N, nb) * _cdiv(rows, rt)

    while steps(n_blk, rows_tile) < TARGET_STEPS:
        if n_blk > 1 and ((n_blk + 1) // 2) * rows_tile >= MIN_ROWS:
            n_blk = (n_blk + 1) // 2
            continue
        new_rt = max(8, _round_up(_cdiv(rows_tile, 2), 8))  # keep multiple of 8
        if new_rt < rows_tile and n_blk * new_rt >= MIN_ROWS:
            rows_tile = new_rt
            continue
        break
    return n_blk, rows_tile


# ----------------------------------------------------------------------------
# Forward wrapper (NCHW in / NCHW out) -- no transposes, pads, or extra casts
# ----------------------------------------------------------------------------
def _forward_dense(x_nchw, w, b, out_dtype):
    N, C, H, W = x_nchw.shape
    rows = (H * W) // 128
    x4 = x_nchw.reshape(N, C, rows, 128)  # free reshape: NCHW is contiguous
    n_blk, rows_tile = _choose_tiling(N, rows)
    grid = (pl.cdiv(N, n_blk), pl.cdiv(rows, rows_tile))

    y4 = pl.pallas_call(
        _prepro_kernel_dense,
        out_shape=jax.ShapeDtypeStruct((N, C, rows, 128), out_dtype),
        grid_spec=pltpu.PrefetchScalarGridSpec(
            num_scalar_prefetch=0,
            grid=grid,
            in_specs=[
                pl.BlockSpec(memory_space=pltpu.MemorySpace.SMEM),  # weight (3,3)
                pl.BlockSpec(memory_space=pltpu.MemorySpace.SMEM),  # bias (3,)
                pl.BlockSpec((n_blk, C, rows_tile, 128), lambda i, j: (i, 0, j, 0)),
            ],
            out_specs=pl.BlockSpec((n_blk, C, rows_tile, 128),
                                   lambda i, j: (i, 0, j, 0)),
        ),
        compiler_params=pltpu.CompilerParams(
            dimension_semantics=("parallel", "parallel"),
        ),
    )(w, b, x4)
    return y4.reshape(N, C, H, W)


def _forward_fallback(x_nchw, w, b, out_dtype):
    # HW not a multiple of 128: keep the 3-D (N, 3, HW) layout (sublane-padded,
    # but only taken for odd spatial sizes).  Smaller lane budget keeps the
    # 3->8 padded, double-buffered buffers well under v5e's 16 MiB default VMEM.
    MAX_LANES = 32 * 1024
    N, C, H, W = x_nchw.shape
    HW = H * W
    x3 = x_nchw.reshape(N, C, HW)

    if HW >= MAX_LANES:
        tile_hw = MAX_LANES                       # 128-aligned; ragged tail masked
        n_blk = 1
    else:
        tile_hw = HW                              # full extent (legal tile)
        n_blk = min(N, max(1, MAX_LANES // HW))
        if N >= 2:                                # keep >= 2 grid steps for v7x
            n_blk = min(n_blk, (N + 1) // 2)
    grid = (pl.cdiv(N, n_blk), pl.cdiv(HW, tile_hw))

    y3 = pl.pallas_call(
        _prepro_kernel_chw,
        out_shape=jax.ShapeDtypeStruct((N, C, HW), out_dtype),
        grid_spec=pltpu.PrefetchScalarGridSpec(
            num_scalar_prefetch=0,
            grid=grid,
            in_specs=[
                pl.BlockSpec(memory_space=pltpu.MemorySpace.SMEM),
                pl.BlockSpec(memory_space=pltpu.MemorySpace.SMEM),
                pl.BlockSpec((n_blk, C, tile_hw), lambda i, j: (i, 0, j)),
            ],
            out_specs=pl.BlockSpec((n_blk, C, tile_hw), lambda i, j: (i, 0, j)),
        ),
        compiler_params=pltpu.CompilerParams(
            dimension_semantics=("parallel", "parallel"),
        ),
    )(w, b, x3)
    return y3.reshape(N, C, H, W)


@functools.partial(jax.jit, static_argnames=("out_dtype",))
def preprocess_conv_layer_forward(x_nchw, w, b, *, out_dtype=jnp.float32):
    """1x1 Conv2d(3,3) preprocessing (scale + bias, optional BGR->RGB swap)."""
    N, C, H, W = x_nchw.shape
    assert C == 3, "preprocess_conv_layer is a Conv2d(3, 3, 1x1): C must be 3"
    if (H * W) % 128 == 0:
        y = _forward_dense(x_nchw, w, b, out_dtype)
    else:
        y = _forward_fallback(x_nchw, w, b, out_dtype)
    # TODO(synk): the wrapped `input_module` is an arbitrary user model; treated as identity here.
    return y


if __name__ == "__main__":
    key = jax.random.PRNGKey(0)
    mean_value = [123.675, 116.28, 103.53]
    std_value = [58.395, 57.12, 57.375]

    # (2,3,16,16): HW % 128 == 0 -> dense 4-D path; (2,3,15,15): 3-D fallback path.
    for (N, C, H, W) in [(2, 3, 16, 16), (2, 3, 15, 15)]:
        key, sub = jax.random.split(key)
        x = jax.random.uniform(sub, (N, C, H, W), dtype=jnp.float32,
                               minval=0.0, maxval=255.0)
        for bgr_flag in (False, True):
            w, b = make_prepro_params(mean_value=mean_value, std_value=std_value,
                                      bgr_flag=bgr_flag)
            y = jax.block_until_ready(preprocess_conv_layer_forward(x, w, b))
            # reference (plain JAX) for sanity
            y_ref = jnp.einsum("oc,nchw->nohw", w, x) + b.reshape(1, 3, 1, 1)
            np.testing.assert_allclose(np.asarray(y), np.asarray(y_ref),
                                       rtol=1e-5, atol=1e-5)

    print("KERNEL_OK")
</pallas_src>

<mosaic_0001>
module attributes {stable_mosaic.version = 11 : i64} {
  func.func @_prepro_kernel_dense(%arg0: i32, %arg1: i32, %arg2: memref<3x3xf32, #tpu.memory_space<smem>>, %arg3: memref<3xf32, #tpu.memory_space<smem>>, %arg4: memref<2x3x2x128xf32, #tpu.memory_space<vmem>>, %arg5: memref<2x3x2x128xf32, #tpu.memory_space<vmem>>) attributes {dimension_semantics = [#tpu.dimension_semantics<parallel>, #tpu.dimension_semantics<parallel>], iteration_bounds = array<i64: 1, 1>, scalar_prefetch = 0 : i64, scratch_operands = 0 : i64, tpu.core_type = #tpu.core_type<tc>, window_params = [{transform_indices = @transform_0, window_bounds = array<i64: 3, 3>}, {transform_indices = @transform_1, window_bounds = array<i64: 3>}, {transform_indices = @transform_2, window_bounds = array<i64: 2, 3, 2, 128>}, {transform_indices = @transform_3, window_bounds = array<i64: 2, 3, 2, 128>}]} {
    %c0 = arith.constant 0 : index
    %c0_0 = arith.constant 0 : index
    %c0_1 = arith.constant 0 : index
    %c0_2 = arith.constant 0 : index
    %0 = vector.load %arg4[%c0, %c0_0, %c0_1, %c0_2] : memref<2x3x2x128xf32, #tpu.memory_space<vmem>>, vector<2x1x2x128xf32>
    %1 = vector.shape_cast %0 : vector<2x1x2x128xf32> to vector<2x2x128xf32>
    %c0_3 = arith.constant 0 : index
    %c1 = arith.constant 1 : index
    %c0_4 = arith.constant 0 : index
    %c0_5 = arith.constant 0 : index
    %2 = vector.load %arg4[%c0_3, %c1, %c0_4, %c0_5] : memref<2x3x2x128xf32, #tpu.memory_space<vmem>>, vector<2x1x2x128xf32>
    %3 = vector.shape_cast %2 : vector<2x1x2x128xf32> to vector<2x2x128xf32>
    %c0_6 = arith.constant 0 : index
    %c2 = arith.constant 2 : index
    %c0_7 = arith.constant 0 : index
    %c0_8 = arith.constant 0 : index
    %4 = vector.load %arg4[%c0_6, %c2, %c0_7, %c0_8] : memref<2x3x2x128xf32, #tpu.memory_space<vmem>>, vector<2x1x2x128xf32>
    %5 = vector.shape_cast %4 : vector<2x1x2x128xf32> to vector<2x2x128xf32>
    %c0_9 = arith.constant 0 : index
    %c0_10 = arith.constant 0 : index
    %6 = memref.load %arg2[%c0_9, %c0_10] : memref<3x3xf32, #tpu.memory_space<smem>>
    %7 = vector.broadcast %6 : f32 to vector<2x2x128xf32>
    %8 = arith.mulf %7, %1 : vector<2x2x128xf32>
    %c0_11 = arith.constant 0 : index
    %c1_12 = arith.constant 1 : index
    %9 = memref.load %arg2[%c0_11, %c1_12] : memref<3x3xf32, #tpu.memory_space<smem>>
    %10 = vector.broadcast %9 : f32 to vector<2x2x128xf32>
    %11 = arith.mulf %10, %3 : vector<2x2x128xf32>
    %12 = arith.addf %8, %11 : vector<2x2x128xf32>
    %c0_13 = arith.constant 0 : index
    %c2_14 = arith.constant 2 : index
    %13 = memref.load %arg2[%c0_13, %c2_14] : memref<3x3xf32, #tpu.memory_space<smem>>
    %14 = vector.broadcast %13 : f32 to vector<2x2x128xf32>
    %15 = arith.mulf %14, %5 : vector<2x2x128xf32>
    %16 = arith.addf %12, %15 : vector<2x2x128xf32>
    %c0_15 = arith.constant 0 : index
    %17 = memref.load %arg3[%c0_15] : memref<3xf32, #tpu.memory_space<smem>>
    %18 = vector.broadcast %17 : f32 to vector<2x2x128xf32>
    %19 = arith.addf %16, %18 : vector<2x2x128xf32>
    %c0_16 = arith.constant 0 : index
    %c0_17 = arith.constant 0 : index
    %c0_18 = arith.constant 0 : index
    %c0_19 = arith.constant 0 : index
    %20 = vector.load %arg5[%c0_16, %c0_17, %c0_18, %c0_19] : memref<2x3x2x128xf32, #tpu.memory_space<vmem>>, vector<2x1x2x128xf32>
    %21 = vector.shape_cast %20 : vector<2x1x2x128xf32> to vector<2x2x128xf32>
    %22 = vector.shape_cast %19 : vector<2x2x128xf32> to vector<2x1x2x128xf32>
    tpu.vector_store %arg5[%c0_16, %c0_17, %c0_18, %c0_19], %22 {strides = array<i32>} : memref<2x3x2x128xf32, #tpu.memory_space<vmem>>, vector<2x1x2x128xf32>,
    %c1_20 = arith.constant 1 : index
    %c0_21 = arith.constant 0 : index
    %23 = memref.load %arg2[%c1_20, %c0_21] : memref<3x3xf32, #tpu.memory_space<smem>>
    %24 = vector.broadcast %23 : f32 to vector<2x2x128xf32>
    %25 = arith.mulf %24, %1 : vector<2x2x128xf32>
    %c1_22 = arith.constant 1 : index
    %c1_23 = arith.constant 1 : index
    %26 = memref.load %arg2[%c1_22, %c1_23] : memref<3x3xf32, #tpu.memory_space<smem>>
    %27 = vector.broadcast %26 : f32 to vector<2x2x128xf32>
    %28 = arith.mulf %27, %3 : vector<2x2x128xf32>
    %29 = arith.addf %25, %28 : vector<2x2x128xf32>
    %c1_24 = arith.constant 1 : index
    %c2_25 = arith.constant 2 : index
    %30 = memref.load %arg2[%c1_24, %c2_25] : memref<3x3xf32, #tpu.memory_space<smem>>
    %31 = vector.broadcast %30 : f32 to vector<2x2x128xf32>
    %32 = arith.mulf %31, %5 : vector<2x2x128xf32>
    %33 = arith.addf %29, %32 : vector<2x2x128xf32>
    %c1_26 = arith.constant 1 : index
    %34 = memref.load %arg3[%c1_26] : memref<3xf32, #tpu.memory_space<smem>>
    %35 = vector.broadcast %34 : f32 to vector<2x2x128xf32>
    %36 = arith.addf %33, %35 : vector<2x2x128xf32>
    %c0_27 = arith.constant 0 : index
    %c1_28 = arith.constant 1 : index
    %c0_29 = arith.constant 0 : index
    %c0_30 = arith.constant 0 : index
    %37 = vector.load %arg5[%c0_27, %c1_28, %c0_29, %c0_30] : memref<2x3x2x128xf32, #tpu.memory_space<vmem>>, vector<2x1x2x128xf32>
    %38 = vector.shape_cast %37 : vector<2x1x2x128xf32> to vector<2x2x128xf32>
    %39 = vector.shape_cast %36 : vector<2x2x128xf32> to vector<2x1x2x128xf32>
    tpu.vector_store %arg5[%c0_27, %c1_28, %c0_29, %c0_30], %39 {strides = array<i32>} : memref<2x3x2x128xf32, #tpu.memory_space<vmem>>, vector<2x1x2x128xf32>,
    %c2_31 = arith.constant 2 : index
    %c0_32 = arith.constant 0 : index
    %40 = memref.load %arg2[%c2_31, %c0_32] : memref<3x3xf32, #tpu.memory_space<smem>>
    %41 = vector.broadcast %40 : f32 to vector<2x2x128xf32>
    %42 = arith.mulf %41, %1 : vector<2x2x128xf32>
    %c2_33 = arith.constant 2 : index
    %c1_34 = arith.constant 1 : index
    %43 = memref.load %arg2[%c2_33, %c1_34] : memref<3x3xf32, #tpu.memory_space<smem>>
    %44 = vector.broadcast %43 : f32 to vector<2x2x128xf32>
    %45 = arith.mulf %44, %3 : vector<2x2x128xf32>
    %46 = arith.addf %42, %45 : vector<2x2x128xf32>
    %c2_35 = arith.constant 2 : index
    %c2_36 = arith.constant 2 : index
    %47 = memref.load %arg2[%c2_35, %c2_36] : memref<3x3xf32, #tpu.memory_space<smem>>
    %48 = vector.broadcast %47 : f32 to vector<2x2x128xf32>
    %49 = arith.mulf %48, %5 : vector<2x2x128xf32>
    %50 = arith.addf %46, %49 : vector<2x2x128xf32>
    %c2_37 = arith.constant 2 : index
    %51 = memref.load %arg3[%c2_37] : memref<3xf32, #tpu.memory_space<smem>>
    %52 = vector.broadcast %51 : f32 to vector<2x2x128xf32>
    %53 = arith.addf %50, %52 : vector<2x2x128xf32>
    %c0_38 = arith.constant 0 : index
    %c2_39 = arith.constant 2 : index
    %c0_40 = arith.constant 0 : index
    %c0_41 = arith.constant 0 : index
    %54 = vector.load %arg5[%c0_38, %c2_39, %c0_40, %c0_41] : memref<2x3x2x128xf32, #tpu.memory_space<vmem>>, vector<2x1x2x128xf32>
    %55 = vector.shape_cast %54 : vector<2x1x2x128xf32> to vector<2x2x128xf32>
    %56 = vector.shape_cast %53 : vector<2x2x128xf32> to vector<2x1x2x128xf32>
    tpu.vector_store %arg5[%c0_38, %c2_39, %c0_40, %c0_41], %56 {strides = array<i32>} : memref<2x3x2x128xf32, #tpu.memory_space<vmem>>, vector<2x1x2x128xf32>,
    return
  }
  func.func @transform_0(%arg0: i32, %arg1: i32) -> (i32, i32) {
    %c0_i32 = arith.constant 0 : i32
    %c0_i32_0 = arith.constant 0 : i32
    %c0_i32_1 = arith.constant 0 : i32
    return %c0_i32, %c0_i32_0 : i32, i32
  }
  func.func @transform_1(%arg0: i32, %arg1: i32) -> i32 {
    %c0_i32 = arith.constant 0 : i32
    %c0_i32_0 = arith.constant 0 : i32
    return %c0_i32 : i32
  }
  func.func @transform_2(%arg0: i32, %arg1: i32) -> (i32, i32, i32, i32) {
    %c0_i32 = arith.constant 0 : i32
    %c0_i32_0 = arith.constant 0 : i32
    %c0_i32_1 = arith.constant 0 : i32
    return %arg0, %c0_i32, %arg1, %c0_i32_0 : i32, i32, i32, i32
  }
  func.func @transform_3(%arg0: i32, %arg1: i32) -> (i32, i32, i32, i32) {
    %c0_i32 = arith.constant 0 : i32
    %c0_i32_0 = arith.constant 0 : i32
    %c0_i32_1 = arith.constant 0 : i32
    return %arg0, %c0_i32, %arg1, %c0_i32_0 : i32, i32, i32, i32
  }
}

</mosaic_0001>

<llo_original>
// kernel: preprocess_conv_layer_forward.1
$region0: #{preprocess_conv_layer_forward.1}
  #allocation0 [shape = 'u32[]', space=smem, size = 0x4, offset = 0x4, fixed_abs, tag = 'smem constant byte address 0x4 - core index']
  #allocation1 [shape = 'u32[144,128]{1,0:T(1,128)}', space=vmem, size = 0x12000, scoped, tag = 'internal scratch']
  %s0 = inlined_call_operand.vmem [shape: f32[3,3], index: 0, kind: input, shape index: {}]
  %s1 = inlined_call_operand.vmem [shape: f32[3], index: 1, kind: input, shape index: {}]
  %s2 = inlined_call_operand.vmem [shape: f32[2,3,2,128], index: 2, kind: input, shape index: {}]
  %s3 = inlined_call_operand.vmem [shape: f32[2,3,2,128], index: 3, kind: output, shape index: {}]
  %s4 = sld [smem:[#allocation0]]
  $region30: #{preprocess_conv_layer_forward.1} parent=0
    _
  %s6 = ssub.s32 1, %s4
  %s7 = scalar_select 0, %s6, %s4
  $region1: #{preprocess_conv_layer_forward.1} parent=0
    #allocation2 [shape = 'u8[2048]{0}', space=smem, size = 0x800, scoped, tag = 'input window, operand 0, single buffered']
    #allocation3 [shape = 's32[1]{0}', space=sflag, size = 0x4, scoped, tag = 'scoped memory for preprocess_conv_layer_forward.1']
    #allocation4 [shape = 'u8[512]{0}', space=smem, size = 0x200, scoped, tag = 'input window, operand 1, single buffered']
    #allocation5 [shape = 's32[1]{0}', space=sflag, size = 0x4, scoped, tag = 'scoped memory for preprocess_conv_layer_forward.1']
    %8 = vsyncpa [#allocation3], 0
    %9 = vsyncpa [#allocation5], 0
    // Predicated region
    $region2: #{preprocess_conv_layer_forward.1} parent=1 // pred_check
      _
    $region3: #{preprocess_conv_layer_forward.1} parent=1 // pred_check_branch
      %11 = sbr.rel (0) target = $region5
    $region4: #{preprocess_conv_layer_forward.1} parent=1 // pred_region
      %s13 = ssub.s32 64, 64
      %14 = vsyncadd [#allocation3], %s13
      %s16 = sshll.u32 %s0, 4
      %s17 = int_to_ptr.vmem [resolvable:$true] %s16
      %19 = dma.vmem_to_smem %s17, 64, [#allocation2], [#allocation3]
    $region5: #{preprocess_conv_layer_forward.1} parent=1 // pred_fallthru
      _
    // Predicated region
    $region6: #{preprocess_conv_layer_forward.1} parent=1 // pred_check
      _
    $region7: #{preprocess_conv_layer_forward.1} parent=1 // pred_check_branch
      %21 = sbr.rel (0) target = $region9
    $region8: #{preprocess_conv_layer_forward.1} parent=1 // pred_region
      %s23 = ssub.s32 16, 16
      %24 = vsyncadd [#allocation5], %s23
      %s26 = sshll.u32 %s1, 4
      %s27 = int_to_ptr.vmem [resolvable:$true] %s26
      %29 = dma.vmem_to_smem %s27, 16, [#allocation4], [#allocation5]
    $region9: #{preprocess_conv_layer_forward.1} parent=1 // pred_fallthru
      _
    // Predicated region
    $region10: #{preprocess_conv_layer_forward.1} parent=1 // pred_check
      _
    $region11: #{preprocess_conv_layer_forward.1} parent=1 // pred_check_branch
      %31 = sbr.rel (0) target = $region13
    $region12: #{preprocess_conv_layer_forward.1} parent=1 // pred_region
      _
    $region13: #{preprocess_conv_layer_forward.1} parent=1 // pred_fallthru
      _
    // Predicated region
    $region14: #{preprocess_conv_layer_forward.1} parent=1 // pred_check
      _
    $region15: #{preprocess_conv_layer_forward.1} parent=1 // pred_check_branch
      %33 = sbr.rel (0) target = $region17
    $region16: #{preprocess_conv_layer_forward.1} parent=1 // pred_region
      %34 = dma.done [#allocation3], 64
    $region17: #{preprocess_conv_layer_forward.1} parent=1 // pred_fallthru
      _
    // Predicated region
    $region18: #{preprocess_conv_layer_forward.1} parent=1 // pred_check
      _
    $region19: #{preprocess_conv_layer_forward.1} parent=1 // pred_check_branch
      %36 = sbr.rel (0) target = $region21
    $region20: #{preprocess_conv_layer_forward.1} parent=1 // pred_region
      %37 = dma.done [#allocation5], 16
    $region21: #{preprocess_conv_layer_forward.1} parent=1 // pred_fallthru
      _
    %38 = sfence
    %v39 = vld [vmem:[%s2] sm:$0x3]
    %v40 = vld [vmem:[%s2 + $0x6] sm:$0x3]
    %s41 = scalar_lea.vmem %s2, 2
    %v42 = vld [vmem:[%s41] sm:$0x3]
    %v43 = vld [vmem:[%s41 + $0x6] sm:$0x3]
    %s44 = scalar_lea.vmem %s2, 4
    %v45 = vld [vmem:[%s44] sm:$0x3]
    %v46 = vld [vmem:[%s44 + $0x6] sm:$0x3]
    %s47 = sld [smem:[#allocation2]]
    %v48 = vstv %s47
    %v49 = vmul.f32 %v48, %v39
    %v50 = vmul.f32 %v48, %v40
    %s51 = sld [smem:[#allocation2 + $0x1]]
    %v52 = vstv %s51
    %v53 = vmul.f32 %v52, %v42
    %v54 = vmul.f32 %v52, %v43
    %v55 = vadd.f32 %v49, %v53
    %v56 = vadd.f32 %v50, %v54
    %s57 = sld [smem:[#allocation2 + $0x2]]
    %v58 = vstv %s57
    %v59 = vmul.f32 %v58, %v45
    %v60 = vmul.f32 %v58, %v46
    %v61 = vadd.f32 %v55, %v59
    %v62 = vadd.f32 %v56, %v60
    %s63 = sld [smem:[#allocation4]]
    %v64 = vstv %s63
    %v65 = vadd.f32 %v61, %v64
    %v66 = vadd.f32 %v62, %v64
    %67 = vst [vmem:[%s3] sm:$0x3] %v65
    %68 = vst [vmem:[%s3 + $0x6] sm:$0x3] %v66
    %s69 = sld [smem:[#allocation2 + $0x80]]
    %v70 = vstv %s69
    %v71 = vmul.f32 %v70, %v39
    %v72 = vmul.f32 %v70, %v40
    %s73 = sld [smem:[#allocation2 + $0x81]]
    %v74 = vstv %s73
    %v75 = vmul.f32 %v74, %v42
    %v76 = vmul.f32 %v74, %v43
    %v77 = vadd.f32 %v71, %v75
    %v78 = vadd.f32 %v72, %v76
    %s79 = sld [smem:[#allocation2 + $0x82]]
    %v80 = vstv %s79
    %v81 = vmul.f32 %v80, %v45
    %v82 = vmul.f32 %v80, %v46
    %v83 = vadd.f32 %v77, %v81
    %v84 = vadd.f32 %v78, %v82
    %s85 = sld [smem:[#allocation4 + $0x1]]
    %v86 = vstv %s85
    %v87 = vadd.f32 %v83, %v86
    %v88 = vadd.f32 %v84, %v86
    %s89 = scalar_lea.vmem %s3, 2
    %90 = vst [vmem:[%s89] sm:$0x3] %v87
    %91 = vst [vmem:[%s89 + $0x6] sm:$0x3] %v88
    %s92 = sld [smem:[#allocation2 + $0x100]]
    %v93 = vstv %s92
    %v94 = vmul.f32 %v93, %v39
    %v95 = vmul.f32 %v93, %v40
    %s96 = sld [smem:[#allocation2 + $0x101]]
    %v97 = vstv %s96
    %v98 = vmul.f32 %v97, %v42
    %v99 = vmul.f32 %v97, %v43
    %v100 = vadd.f32 %v94, %v98
    %v101 = vadd.f32 %v95, %v99
    %s102 = sld [smem:[#allocation2 + $0x102]]
    %v103 = vstv %s102
    %v104 = vmul.f32 %v103, %v45
    %v105 = vmul.f32 %v103, %v46
    %v106 = vadd.f32 %v100, %v104
    %v107 = vadd.f32 %v101, %v105
    %s108 = sld [smem:[#allocation4 + $0x2]]
    %v109 = vstv %s108
    %v110 = vadd.f32 %v106, %v109
    %v111 = vadd.f32 %v107, %v109
    %s112 = scalar_lea.vmem %s3, 4
    %113 = vst [vmem:[%s112] sm:$0x3] %v110
    %114 = vst [vmem:[%s112 + $0x6] sm:$0x3] %v111
    // Predicated region
    $region22: #{preprocess_conv_layer_forward.1} parent=1 // pred_check
      _
    $region23: #{preprocess_conv_layer_forward.1} parent=1 // pred_check_branch
      %116 = sbr.rel (0) target = $region25
    $region24: #{preprocess_conv_layer_forward.1} parent=1 // pred_region
      _
    $region25: #{preprocess_conv_layer_forward.1} parent=1 // pred_fallthru
      _
    // Predicated region
    $region26: #{preprocess_conv_layer_forward.1} parent=1 // pred_check
      _
    $region27: #{preprocess_conv_layer_forward.1} parent=1 // pred_check_branch
      %118 = sbr.rel (0) target = $region29
    $region28: #{preprocess_conv_layer_forward.1} parent=1 // pred_region
      _
    $region29: #{preprocess_conv_layer_forward.1} parent=1 // pred_fallthru
      _
    %119 = vsyncpa [#allocation3], 1
    %120 = vsyncpa [#allocation5], 1

</llo_original>
